<compile_context>
chip_gen: v7x
topology: tpu7x:2x2x1
jax: 0.10.0
libtpu: 0.0.40
codegen_flags: <defaults>
</compile_context>

<pallas_src>
from functools import partial
from typing import NamedTuple

import jax
import jax.numpy as jnp
from jax.experimental import pallas as pl
from jax.experimental.pallas import tpu as pltpu


def _round_up(n, m):
    return ((n + m - 1) // m) * m


class PreparedParams(NamedTuple):
    w: jax.Array          # (L, D_pad, D_pad) bf16 packed weights (torch weight.T, zero-padded)
    b: jax.Array          # (L, 1, D_pad)     f32  packed biases  (zero-padded)
    in_dim: int
    out_dim: int
    d_pad: int
    n_layers: int


def prepare_params(params, *, mxu_dtype=jnp.bfloat16):
    """One-time parameter prep (hoisted out of the per-step forward).

    params: list of (w, b) with w: (in, out) f32 (== torch weight.T), b: (1, out) f32.
    Every layer is zero-padded to a common (D_pad, D_pad) block so the whole stack
    is a single contiguous weight buffer (one DMA) + a single bias buffer.
    Zero padding is exact: padded activation columns stay 0 through ReLU.
    """
    dims = [params[0][0].shape[0]] + [w.shape[1] for (w, _) in params]
    d_pad = _round_up(max(dims), 128)
    n_layers = len(params)

    w_packed = jnp.zeros((n_layers, d_pad, d_pad), mxu_dtype)
    b_packed = jnp.zeros((n_layers, 1, d_pad), jnp.float32)
    for i, (w, b) in enumerate(params):
        fi, fo = w.shape
        w_packed = w_packed.at[i, :fi, :fo].set(w.astype(mxu_dtype))
        b_packed = b_packed.at[i, 0, :fo].set(b.reshape(-1).astype(jnp.float32))

    return PreparedParams(w=w_packed, b=b_packed, in_dim=dims[0],
                          out_dim=dims[-1], d_pad=d_pad, n_layers=n_layers)


def _mlp_kernel(x_ref, w_ref, b_ref, out_ref, *, n_layers, discrete):
    """x: (B, D_pad) f32, w: (L, D_pad, D_pad) bf16, b: (L, 1, D_pad) f32,
    out: (B, D_pad) f32.  Whole net resident in VMEM, gridless."""
    h = x_ref[...]                                    # f32 activations
    for i in range(n_layers):                         # static unrolled layer loop
        w = w_ref[i]                                  # (D_pad, D_pad) bf16, static slice
        b = b_ref[i]                                  # (1, D_pad) f32
        acc = jnp.dot(h.astype(w.dtype), w,
                      preferred_element_type=jnp.float32)   # MXU, f32 accumulate
        h = jnp.maximum(acc + b, 0.0)                 # ReLU after every layer

    if discrete:
        # torch.nn.functional.softmax(dataState, dim=0): reduce over the batch axis.
        # Exact reciprocal so probabilities sum to 1 (EUP slot either way).
        m = jnp.max(h, axis=0, keepdims=True)
        e = jnp.exp(h - m)
        denom = jnp.sum(e, axis=0, keepdims=True)
        out_ref[...] = e * pl.reciprocal(denom, approx=False)
    else:
        # torch.sigmoid(dataState) — exact.
        out_ref[...] = pl.reciprocal(1.0 + jnp.exp(-h), approx=False)


def neural_net_forward(x, prepared: PreparedParams, action_space):
    """Forward pass using pre-packed parameters (call prepare_params once).

    x: (B, networkNumberOfInputs) f32 (batched observations; dim 0 is the softmax axis).
    """
    if action_space.startswith("Discrete"):
        discrete = True
    elif action_space.startswith("Box"):
        discrete = False
    else:
        raise NotImplementedError(
            "NeuralNet.forward(): Unimplemented action space '{}'".format(action_space))

    B, in_dim = x.shape
    if in_dim != prepared.in_dim:
        raise ValueError("input feature dim {} != network input dim {}".format(
            in_dim, prepared.in_dim))
    d_pad = prepared.d_pad

    # Only the feature (lane) axis is padded; batch stays natural -> no in-kernel mask.
    x_p = jnp.pad(x.astype(jnp.float32), ((0, 0), (0, d_pad - in_dim)))

    # Advisory cost + VMEM budget from the real packed footprint.
    w_bytes = int(prepared.w.size) * prepared.w.dtype.itemsize
    b_bytes = int(prepared.b.size) * prepared.b.dtype.itemsize
    io_bytes = 2 * B * d_pad * 4
    bytes_accessed = w_bytes + b_bytes + io_bytes
    flops = 2 * B * prepared.n_layers * d_pad * d_pad
    vmem_limit = int(min(48 * 1024 * 1024,                       # v7x-safe (64 MiB physical)
                         max(4 * 1024 * 1024, 2 * bytes_accessed + (1 << 20))))

    kernel = partial(_mlp_kernel, n_layers=prepared.n_layers, discrete=discrete)

    out_p = pl.pallas_call(
        kernel,
        out_shape=jax.ShapeDtypeStruct((B, d_pad), jnp.float32),
        in_specs=[pl.BlockSpec(memory_space=pltpu.MemorySpace.VMEM)] * 3,
        out_specs=pl.BlockSpec(memory_space=pltpu.MemorySpace.VMEM),
        compiler_params=pltpu.CompilerParams(vmem_limit_bytes=vmem_limit),
        cost_estimate=pl.CostEstimate(
            flops=flops,
            transcendentals=B * d_pad,
            bytes_accessed=bytes_accessed),
    )(x_p, prepared.w, prepared.b)

    return out_p[:, :prepared.out_dim]


def init_params(key, network_n_inputs, hidden_widths, network_n_outputs):
    """Deterministic parameter init mirroring the module's __init__:
    xavier_uniform_ on weights (via init_weights), PyTorch-default uniform bias."""
    widths = [network_n_inputs] + list(hidden_widths) + [network_n_outputs]
    params = []
    for i in range(len(widths) - 1):
        fan_in, fan_out = widths[i], widths[i + 1]
        key, kw, kb = jax.random.split(key, 3)
        # torch.nn.init.xavier_uniform_
        bound_w = (6.0 / (fan_in + fan_out)) ** 0.5
        w_t = jax.random.uniform(kw, (fan_in, fan_out), jnp.float32,
                                 minval=-bound_w, maxval=bound_w)  # stored as weight.T
        # torch.nn.Linear default bias init: U(-1/sqrt(fan_in), 1/sqrt(fan_in))
        bound_b = 1.0 / (fan_in ** 0.5)
        b = jax.random.uniform(kb, (1, fan_out), jnp.float32,
                               minval=-bound_b, maxval=bound_b)
        params.append((w_t, b))
    return params


if __name__ == "__main__":
    key = jax.random.PRNGKey(0)

    # Small shapes consistent with the module: MLP on flat observations.
    batch = 2
    network_n_inputs = 32
    hidden_widths = [64, 32]
    network_n_outputs = 8

    key, kx, kp = jax.random.split(key, 3)
    x = jax.random.normal(kx, (batch, network_n_inputs), jnp.float32)
    params = init_params(kp, network_n_inputs, hidden_widths, network_n_outputs)

    # One-time parameter prep (hoisted out of the per-step forward).
    prepared = prepare_params(params)

    # Pure-JAX reference mirroring the kernel math (bf16 MXU feeds, f32 accum).
    h = x
    for w, b in params:
        h = jnp.maximum(
            jnp.dot(h.astype(jnp.bfloat16), w.astype(jnp.bfloat16),
                    preferred_element_type=jnp.float32) + b, 0.0)

    # Discrete path: softmax over dim=0 (batch axis).
    out_disc = jax.block_until_ready(
        neural_net_forward(x, prepared, "Discrete(8)"))
    ref_disc = jax.nn.softmax(h, axis=0)
    assert out_disc.shape == (batch, network_n_outputs)
    assert jnp.allclose(out_disc, ref_disc, atol=1e-3, rtol=1e-3)
    # Probabilities sum to 1 along dim 0 (exact reciprocal now).
    assert jnp.allclose(out_disc.sum(axis=0), jnp.ones((network_n_outputs,)),
                        atol=1e-5, rtol=1e-5)

    # Box path: elementwise sigmoid.
    out_box = jax.block_until_ready(neural_net_forward(x, prepared, "Box(8)"))
    ref_box = jax.nn.sigmoid(h)
    assert out_box.shape == (batch, network_n_outputs)
    assert jnp.allclose(out_box, ref_box, atol=1e-3, rtol=1e-3)

    print("KERNEL_OK")
</pallas_src>

<mosaic_0001>
module attributes {stable_mosaic.version = 11 : i64} {
  func.func @_mlp_kernel(%arg0: memref<2x128xf32, #tpu.memory_space<vmem>>, %arg1: memref<3x128x128xbf16, #tpu.memory_space<vmem>>, %arg2: memref<3x1x128xf32, #tpu.memory_space<vmem>>, %arg3: memref<2x128xf32, #tpu.memory_space<vmem>>) attributes {dimension_semantics = [], scalar_prefetch = 0 : i64, scratch_operands = 0 : i64, tpu.core_type = #tpu.core_type<tc>} {
    %c0 = arith.constant 0 : index
    %c0_0 = arith.constant 0 : index
    %0 = vector.load %arg0[%c0, %c0_0] : memref<2x128xf32, #tpu.memory_space<vmem>>, vector<2x128xf32>
    %c0_1 = arith.constant 0 : index
    %c0_2 = arith.constant 0 : index
    %c0_3 = arith.constant 0 : index
    %1 = vector.load %arg1[%c0_1, %c0_2, %c0_3] : memref<3x128x128xbf16, #tpu.memory_space<vmem>>, vector<1x128x128xbf16>
    %2 = vector.shape_cast %1 : vector<1x128x128xbf16> to vector<128x128xbf16>
    %c0_4 = arith.constant 0 : index
    %c0_5 = arith.constant 0 : index
    %c0_6 = arith.constant 0 : index
    %3 = vector.load %arg2[%c0_4, %c0_5, %c0_6] : memref<3x1x128xf32, #tpu.memory_space<vmem>>, vector<1x1x128xf32>
    %4 = vector.shape_cast %3 : vector<1x1x128xf32> to vector<1x128xf32>
    %5 = arith.truncf %0 : vector<2x128xf32> to vector<2x128xbf16>
    %cst = arith.constant dense<0.000000e+00> : vector<2x128xf32>
    %6 = tpu.matmul %5, %2, %cst {dimension_numbers = #tpu.dot_dimension_numbers<[1], [0], [0], [1], [0, 0, 1, 1], [], []>} : vector<2x128xbf16>, vector<128x128xbf16>, vector<2x128xf32> -> vector<2x128xf32>
    %7 = vector.broadcast %4 : vector<1x128xf32> to vector<2x128xf32>
    %8 = arith.addf %6, %7 : vector<2x128xf32>
    %cst_7 = arith.constant 0.000000e+00 : f32
    %9 = vector.broadcast %cst_7 : f32 to vector<2x128xf32>
    %10 = arith.maximumf %8, %9 : vector<2x128xf32>
    %c1 = arith.constant 1 : index
    %c0_8 = arith.constant 0 : index
    %c0_9 = arith.constant 0 : index
    %11 = vector.load %arg1[%c1, %c0_8, %c0_9] : memref<3x128x128xbf16, #tpu.memory_space<vmem>>, vector<1x128x128xbf16>
    %12 = vector.shape_cast %11 : vector<1x128x128xbf16> to vector<128x128xbf16>
    %c1_10 = arith.constant 1 : index
    %c0_11 = arith.constant 0 : index
    %c0_12 = arith.constant 0 : index
    %13 = vector.load %arg2[%c1_10, %c0_11, %c0_12] : memref<3x1x128xf32, #tpu.memory_space<vmem>>, vector<1x1x128xf32>
    %14 = vector.shape_cast %13 : vector<1x1x128xf32> to vector<1x128xf32>
    %15 = arith.truncf %10 : vector<2x128xf32> to vector<2x128xbf16>
    %cst_13 = arith.constant dense<0.000000e+00> : vector<2x128xf32>
    %16 = tpu.matmul %15, %12, %cst_13 {dimension_numbers = #tpu.dot_dimension_numbers<[1], [0], [0], [1], [0, 0, 1, 1], [], []>} : vector<2x128xbf16>, vector<128x128xbf16>, vector<2x128xf32> -> vector<2x128xf32>
    %17 = vector.broadcast %14 : vector<1x128xf32> to vector<2x128xf32>
    %18 = arith.addf %16, %17 : vector<2x128xf32>
    %cst_14 = arith.constant 0.000000e+00 : f32
    %19 = vector.broadcast %cst_14 : f32 to vector<2x128xf32>
    %20 = arith.maximumf %18, %19 : vector<2x128xf32>
    %c2 = arith.constant 2 : index
    %c0_15 = arith.constant 0 : index
    %c0_16 = arith.constant 0 : index
    %21 = vector.load %arg1[%c2, %c0_15, %c0_16] : memref<3x128x128xbf16, #tpu.memory_space<vmem>>, vector<1x128x128xbf16>
    %22 = vector.shape_cast %21 : vector<1x128x128xbf16> to vector<128x128xbf16>
    %c2_17 = arith.constant 2 : index
    %c0_18 = arith.constant 0 : index
    %c0_19 = arith.constant 0 : index
    %23 = vector.load %arg2[%c2_17, %c0_18, %c0_19] : memref<3x1x128xf32, #tpu.memory_space<vmem>>, vector<1x1x128xf32>
    %24 = vector.shape_cast %23 : vector<1x1x128xf32> to vector<1x128xf32>
    %25 = arith.truncf %20 : vector<2x128xf32> to vector<2x128xbf16>
    %cst_20 = arith.constant dense<0.000000e+00> : vector<2x128xf32>
    %26 = tpu.matmul %25, %22, %cst_20 {dimension_numbers = #tpu.dot_dimension_numbers<[1], [0], [0], [1], [0, 0, 1, 1], [], []>} : vector<2x128xbf16>, vector<128x128xbf16>, vector<2x128xf32> -> vector<2x128xf32>
    %27 = vector.broadcast %24 : vector<1x128xf32> to vector<2x128xf32>
    %28 = arith.addf %26, %27 : vector<2x128xf32>
    %cst_21 = arith.constant 0.000000e+00 : f32
    %29 = vector.broadcast %cst_21 : f32 to vector<2x128xf32>
    %30 = arith.maximumf %28, %29 : vector<2x128xf32>
    %cst_22 = arith.constant dense<0xFF800000> : vector<128xf32>
    %31 = vector.multi_reduction <maximumf>, %30, %cst_22 [0] : vector<2x128xf32> to vector<128xf32>
    %32 = vector.shape_cast %31 : vector<128xf32> to vector<1x128xf32>
    %33 = vector.broadcast %32 : vector<1x128xf32> to vector<2x128xf32>
    %34 = arith.subf %30, %33 : vector<2x128xf32>
    %35 = math.exp %34 : vector<2x128xf32>
    %cst_23 = arith.constant dense<0.000000e+00> : vector<128xf32>
    %36 = vector.multi_reduction <add>, %35, %cst_23 [0] : vector<2x128xf32> to vector<128xf32>
    %37 = vector.shape_cast %36 : vector<128xf32> to vector<1x128xf32>
    %38 = tpu.reciprocal %37 : vector<1x128xf32> -> vector<1x128xf32>
    %39 = vector.broadcast %38 : vector<1x128xf32> to vector<2x128xf32>
    %40 = arith.mulf %35, %39 : vector<2x128xf32>
    %c0_24 = arith.constant 0 : index
    %c0_25 = arith.constant 0 : index
    %41 = vector.load %arg3[%c0_24, %c0_25] : memref<2x128xf32, #tpu.memory_space<vmem>>, vector<2x128xf32>
    tpu.vector_store %arg3[%c0_24, %c0_25], %40 {strides = array<i32>} : memref<2x128xf32, #tpu.memory_space<vmem>>, vector<2x128xf32>,
    return
  }
}

</mosaic_0001>

<llo_original>
// kernel: tpu_custom_call.1
$region0: #{tpu_custom_call.1}
  #allocation0 [shape = 'u32[]', space=smem, size = 0x4, offset = 0x4, fixed_abs, tag = 'smem constant byte address 0x4 - core index']
  #allocation1 [shape = 'u32[144,128]{1,0:T(1,128)}', space=vmem, size = 0x12000, scoped, tag = 'internal scratch']
  %s0 = inlined_call_operand.hbm [shape: f32[2,128], index: 0, kind: input, shape index: {}]
  %s1 = inlined_call_operand.hbm [shape: bf16[3,128,128], index: 1, kind: input, shape index: {}]
  %s2 = inlined_call_operand.vmem [shape: f32[3,1,128], index: 2, kind: input, shape index: {}]
  %s3 = inlined_call_operand.hbm [shape: f32[2,128], index: 3, kind: output, shape index: {}]
  %s4 = sld [smem:[#allocation0]]
  $region30: #{tpu_custom_call.1} parent=0
    _
  %s6 = ssub.s32 1, %s4
  %s7 = scalar_select 0, %s6, %s4
  $region1: #{tpu_custom_call.1} parent=0
    #allocation2 [shape = 'u8[1024]{0}', space=vmem, size = 0x400, scoped, tag = 'input window, operand 0, single buffered']
    #allocation3 [shape = 's32[1]{0}', space=sflag, size = 0x4, scoped, tag = 'scoped memory for tpu_custom_call.1']
    #allocation4 [shape = 's32[1]{0}', space=sflag, size = 0x4, scoped, tag = 'scoped memory for tpu_custom_call.1']
    #allocation5 [shape = 'u8[98304]{0}', space=vmem, size = 0x18000, scoped, tag = 'input window, operand 1, single buffered']
    #allocation6 [shape = 's32[1]{0}', space=sflag, size = 0x4, scoped, tag = 'scoped memory for tpu_custom_call.1']
    #allocation7 [shape = 'u8[1024]{0}', space=vmem, size = 0x400, scoped, tag = 'output window, operand 0, single buffered']
    %8 = vsyncpa [#allocation3], 0
    %9 = vsyncpa [#allocation6], 0
    %10 = vsyncpa [#allocation4], 0
    // Predicated region
    $region2: #{tpu_custom_call.1} parent=1 // pred_check
      _
    $region3: #{tpu_custom_call.1} parent=1 // pred_check_branch
      %12 = sbr.rel (0) target = $region5
    $region4: #{tpu_custom_call.1} parent=1 // pred_region
      %s14 = ssub.s32 32, 32
      %15 = vsyncadd [#allocation3], %s14
      %s17 = sshll.u32 [#allocation2], 4
      %s18 = int_to_ptr.vmem [resolvable:$true] %s17
      %20 = dma.hbm_to_vmem [thread:$0]  %s0, 32, %s18, [#allocation3]
    $region5: #{tpu_custom_call.1} parent=1 // pred_fallthru
      _
    // Predicated region
    $region6: #{tpu_custom_call.1} parent=1 // pred_check
      _
    $region7: #{tpu_custom_call.1} parent=1 // pred_check_branch
      %22 = sbr.rel (0) target = $region9
    $region8: #{tpu_custom_call.1} parent=1 // pred_region
      %s24 = ssub.s32 3072, 3072
      %25 = vsyncadd [#allocation6], %s24
      %s26 = sshll.u32 [#allocation5], 4
      %s27 = int_to_ptr.vmem [resolvable:$true] %s26
      %32 = dma.hbm_to_vmem [thread:$0]  %s1, 3072, %s27, [#allocation6], 64, 64, 4
    $region9: #{tpu_custom_call.1} parent=1 // pred_fallthru
      _
    // Predicated region
    $region10: #{tpu_custom_call.1} parent=1 // pred_check
      _
    $region11: #{tpu_custom_call.1} parent=1 // pred_check_branch
      %34 = sbr.rel (0) target = $region13
    $region12: #{tpu_custom_call.1} parent=1 // pred_region
      _
    $region13: #{tpu_custom_call.1} parent=1 // pred_fallthru
      _
    // Predicated region
    $region14: #{tpu_custom_call.1} parent=1 // pred_check
      _
    $region15: #{tpu_custom_call.1} parent=1 // pred_check_branch
      %36 = sbr.rel (0) target = $region17
    $region16: #{tpu_custom_call.1} parent=1 // pred_region
      %37 = dma.done [#allocation3], 32
    $region17: #{tpu_custom_call.1} parent=1 // pred_fallthru
      _
    // Predicated region
    $region18: #{tpu_custom_call.1} parent=1 // pred_check
      _
    $region19: #{tpu_custom_call.1} parent=1 // pred_check_branch
      %39 = sbr.rel (0) target = $region21
    $region20: #{tpu_custom_call.1} parent=1 // pred_region
      %40 = dma.done [#allocation6], 3072
    $region21: #{tpu_custom_call.1} parent=1 // pred_fallthru
      _
    %v42 = vld [vmem:[#allocation2] sm:$0x3]
    %v43 = vld [vmem:[#allocation5] sm:$0xf]
    %v44 = vld [vmem:[#allocation5 + $0x4] sm:$0xf]
    %v45 = vld [vmem:[#allocation5 + $0x8] sm:$0xf]
    %v46 = vld [vmem:[#allocation5 + $0xc] sm:$0xf]
    %v47 = vld [vmem:[#allocation5 + $0x10] sm:$0xf]
    %v48 = vld [vmem:[#allocation5 + $0x14] sm:$0xf]
    %v49 = vld [vmem:[#allocation5 + $0x18] sm:$0xf]
    %v50 = vld [vmem:[#allocation5 + $0x1c] sm:$0xf]
    %v51 = vld [vmem:[#allocation5 + $0x20] sm:$0xf]
    %v52 = vld [vmem:[#allocation5 + $0x24] sm:$0xf]
    %v53 = vld [vmem:[#allocation5 + $0x28] sm:$0xf]
    %v54 = vld [vmem:[#allocation5 + $0x2c] sm:$0xf]
    %v55 = vld [vmem:[#allocation5 + $0x30] sm:$0xf]
    %v56 = vld [vmem:[#allocation5 + $0x34] sm:$0xf]
    %v57 = vld [vmem:[#allocation5 + $0x38] sm:$0xf]
    %v58 = vld [vmem:[#allocation5 + $0x3c] sm:$0xf]
    %v59 = vld [vmem:[%s2] sm:$0x1]
    %v60 = vpack.c.bf16 %v42, %v42
    %v62 = vlaneseq
    %v63 = vshrl.u32 %v62, 7
    %v64 = vsub.s32 0, %v63
    %v65 = vrot.slane %v59, %v64
    %v83 = vunpack.c.l.b16 %v43
    %v84 = vunpack.c.l.b16 %v44
    %v85 = vunpack.c.l.b16 %v45
    %v86 = vunpack.c.l.b16 %v46
    %v87 = vunpack.c.l.b16 %v47
    %v88 = vunpack.c.l.b16 %v48
    %v89 = vunpack.c.l.b16 %v49
    %v90 = vunpack.c.l.b16 %v50
    %v91 = vunpack.c.l.b16 %v51
    %v92 = vunpack.c.l.b16 %v52
    %v93 = vunpack.c.l.b16 %v53
    %v94 = vunpack.c.l.b16 %v54
    %v95 = vunpack.c.l.b16 %v55
    %v96 = vunpack.c.l.b16 %v56
    %v97 = vunpack.c.l.b16 %v57
    %v98 = vunpack.c.l.b16 %v58
    %v99 = vpack.c.b16 %v84, %v83
    %v100 = vpack.c.b16 %v86, %v85
    %v101 = vpack.c.b16 %v88, %v87
    %v102 = vpack.c.b16 %v90, %v89
    %v103 = vpack.c.b16 %v92, %v91
    %v104 = vpack.c.b16 %v94, %v93
    %v105 = vpack.c.b16 %v96, %v95
    %v106 = vpack.c.b16 %v98, %v97
    %115 = vmatprep.subr.bf16.mxu0 0
    %116 = vmatpush1.bf16.msra.mxu0 %v99
    %117 = vmatprep.subr.bf16.mxu0 0
    %118 = vmatpush1.bf16.msra.mxu0 %v100
    %119 = vmatprep.subr.bf16.mxu0 0
    %120 = vmatpush1.bf16.msra.mxu0 %v101
    %121 = vmatprep.subr.bf16.mxu0 0
    %122 = vmatpush1.bf16.msra.mxu0 %v102
    %123 = vmatprep.subr.bf16.mxu0 0
    %124 = vmatpush1.bf16.msra.mxu0 %v103
    %125 = vmatprep.subr.bf16.mxu0 0
    %126 = vmatpush1.bf16.msra.mxu0 %v104
    %127 = vmatprep.subr.bf16.mxu0 0
    %128 = vmatpush1.bf16.msra.mxu0 %v105
    %129 = vmatprep.subr.bf16.mxu0 0
    %130 = vmatpush1.bf16.msra.mxu0 %v106
    %131 = vmatprep.subr.bf16.mxu0 0
    %132 = vmatpush1.bf16.msra.mxu0 0
    %133 = vmatprep.subr.bf16.mxu0 0
    %134 = vmatpush1.bf16.msra.mxu0 0
    %135 = vmatprep.subr.bf16.mxu0 0
    %136 = vmatpush1.bf16.msra.mxu0 0
    %137 = vmatprep.subr.bf16.mxu0 0
    %138 = vmatpush1.bf16.msra.mxu0 0
    %139 = vmatprep.subr.bf16.mxu0 0
    %140 = vmatpush1.bf16.msra.mxu0 0
    %141 = vmatprep.subr.bf16.mxu0 0
    %142 = vmatpush1.bf16.msra.mxu0 0
    %143 = vmatprep.subr.bf16.mxu0 0
    %144 = vmatpush1.bf16.msra.mxu0 0
    %145 = vmatprep.subr.bf16.mxu0 0
    %146 = vmatpush1.bf16.msra.mxu0 0
    %147 = vmatprep.mubr.bf16.mxu0 0
    %148 = vmatmul.mubr.bf16.gmra.mrb[0].mxu0 %v60
    %v149 = vpop.f32.mrb[0].mxu0
    %v150 = vadd.f32 %v65, %v149
    %v151 = vpop.f32.mrb[0].mxu0
    %v152 = vpop.f32.mrb[0].mxu0
    %v153 = vpop.f32.mrb[0].mxu0
    %154 = vdwg.mxu0
    %v155 = vmax.f32 %v150, 0.0
    %s156 = scalar_lea.vmem [#allocation5], 64
    %v157 = vld [vmem:[%s156] sm:$0xf]
    %v158 = vld [vmem:[%s156 + $0x4] sm:$0xf]
    %v159 = vld [vmem:[%s156 + $0x8] sm:$0xf]
    %v160 = vld [vmem:[%s156 + $0xc] sm:$0xf]
    %v161 = vld [vmem:[%s156 + $0x10] sm:$0xf]
    %v162 = vld [vmem:[%s156 + $0x14] sm:$0xf]
    %v163 = vld [vmem:[%s156 + $0x18] sm:$0xf]
    %v164 = vld [vmem:[%s156 + $0x1c] sm:$0xf]
    %v165 = vld [vmem:[%s156 + $0x20] sm:$0xf]
    %v166 = vld [vmem:[%s156 + $0x24] sm:$0xf]
    %v167 = vld [vmem:[%s156 + $0x28] sm:$0xf]
    %v168 = vld [vmem:[%s156 + $0x2c] sm:$0xf]
    %v169 = vld [vmem:[%s156 + $0x30] sm:$0xf]
    %v170 = vld [vmem:[%s156 + $0x34] sm:$0xf]
    %v171 = vld [vmem:[%s156 + $0x38] sm:$0xf]
    %v172 = vld [vmem:[%s156 + $0x3c] sm:$0xf]
    %s173 = scalar_lea.vmem %s2, 1
    %v174 = vld [vmem:[%s173] sm:$0x1]
    %v175 = vpack.c.bf16 %v155, %v155
    %v177 = vlaneseq
    %v178 = vshrl.u32 %v177, 7
    %v179 = vsub.s32 0, %v178
    %v180 = vrot.slane %v174, %v179
    %v198 = vunpack.c.l.b16 %v157
    %v199 = vunpack.c.l.b16 %v158
    %v200 = vunpack.c.l.b16 %v159
    %v201 = vunpack.c.l.b16 %v160
    %v202 = vunpack.c.l.b16 %v161
    %v203 = vunpack.c.l.b16 %v162
    %v204 = vunpack.c.l.b16 %v163
    %v205 = vunpack.c.l.b16 %v164
    %v206 = vunpack.c.l.b16 %v165
    %v207 = vunpack.c.l.b16 %v166
    %v208 = vunpack.c.l.b16 %v167
    %v209 = vunpack.c.l.b16 %v168
    %v210 = vunpack.c.l.b16 %v169
    %v211 = vunpack.c.l.b16 %v170
    %v212 = vunpack.c.l.b16 %v171
    %v213 = vunpack.c.l.b16 %v172
    %v214 = vpack.c.b16 %v199, %v198
    %v215 = vpack.c.b16 %v201, %v200
    %v216 = vpack.c.b16 %v203, %v202
    %v217 = vpack.c.b16 %v205, %v204
    %v218 = vpack.c.b16 %v207, %v206
    %v219 = vpack.c.b16 %v209, %v208
    %v220 = vpack.c.b16 %v211, %v210
    %v221 = vpack.c.b16 %v213, %v212
    %230 = vmatprep.subr.bf16.mxu0 0
    %231 = vmatpush1.bf16.msra.mxu0 %v214
    %232 = vmatprep.subr.bf16.mxu0 0
    %233 = vmatpush1.bf16.msra.mxu0 %v215
    %234 = vmatprep.subr.bf16.mxu0 0
    %235 = vmatpush1.bf16.msra.mxu0 %v216
    %236 = vmatprep.subr.bf16.mxu0 0
    %237 = vmatpush1.bf16.msra.mxu0 %v217
    %238 = vmatprep.subr.bf16.mxu0 0
    %239 = vmatpush1.bf16.msra.mxu0 %v218
    %240 = vmatprep.subr.bf16.mxu0 0
    %241 = vmatpush1.bf16.msra.mxu0 %v219
    %242 = vmatprep.subr.bf16.mxu0 0
    %243 = vmatpush1.bf16.msra.mxu0 %v220
    %244 = vmatprep.subr.bf16.mxu0 0
    %245 = vmatpush1.bf16.msra.mxu0 %v221
    %246 = vmatprep.subr.bf16.mxu0 0
    %247 = vmatpush1.bf16.msra.mxu0 0
    %248 = vmatprep.subr.bf16.mxu0 0
    %249 = vmatpush1.bf16.msra.mxu0 0
    %250 = vmatprep.subr.bf16.mxu0 0
    %251 = vmatpush1.bf16.msra.mxu0 0
    %252 = vmatprep.subr.bf16.mxu0 0
    %253 = vmatpush1.bf16.msra.mxu0 0
    %254 = vmatprep.subr.bf16.mxu0 0
    %255 = vmatpush1.bf16.msra.mxu0 0
    %256 = vmatprep.subr.bf16.mxu0 0
    %257 = vmatpush1.bf16.msra.mxu0 0
    %258 = vmatprep.subr.bf16.mxu0 0
    %259 = vmatpush1.bf16.msra.mxu0 0
    %260 = vmatprep.subr.bf16.mxu0 0
    %261 = vmatpush1.bf16.msra.mxu0 0
    %262 = vmatprep.mubr.bf16.mxu0 0
    %263 = vmatmul.mubr.bf16.gmra.mrb[0].mxu0 %v175
    %v264 = vpop.f32.mrb[0].mxu0
    %v265 = vadd.f32 %v180, %v264
    %v266 = vpop.f32.mrb[0].mxu0
    %v267 = vpop.f32.mrb[0].mxu0
    %v268 = vpop.f32.mrb[0].mxu0
    %269 = vdwg.mxu0
    %v270 = vmax.f32 %v265, 0.0
    %s271 = scalar_lea.vmem [#allocation5], 128
    %v272 = vld [vmem:[%s271] sm:$0xf]
    %v273 = vld [vmem:[%s271 + $0x4] sm:$0xf]
    %v274 = vld [vmem:[%s271 + $0x8] sm:$0xf]
    %v275 = vld [vmem:[%s271 + $0xc] sm:$0xf]
    %v276 = vld [vmem:[%s271 + $0x10] sm:$0xf]
    %v277 = vld [vmem:[%s271 + $0x14] sm:$0xf]
    %v278 = vld [vmem:[%s271 + $0x18] sm:$0xf]
    %v279 = vld [vmem:[%s271 + $0x1c] sm:$0xf]
    %v280 = vld [vmem:[%s271 + $0x20] sm:$0xf]
    %v281 = vld [vmem:[%s271 + $0x24] sm:$0xf]
    %v282 = vld [vmem:[%s271 + $0x28] sm:$0xf]
    %v283 = vld [vmem:[%s271 + $0x2c] sm:$0xf]
    %v284 = vld [vmem:[%s271 + $0x30] sm:$0xf]
    %v285 = vld [vmem:[%s271 + $0x34] sm:$0xf]
    %v286 = vld [vmem:[%s271 + $0x38] sm:$0xf]
    %v287 = vld [vmem:[%s271 + $0x3c] sm:$0xf]
    %s288 = scalar_lea.vmem %s2, 2
    %v289 = vld [vmem:[%s288] sm:$0x1]
    %v290 = vpack.c.bf16 %v270, %v270
    %v292 = vlaneseq
    %v293 = vshrl.u32 %v292, 7
    %v294 = vsub.s32 0, %v293
    %v295 = vrot.slane %v289, %v294
    %v313 = vunpack.c.l.b16 %v272
    %v314 = vunpack.c.l.b16 %v273
    %v315 = vunpack.c.l.b16 %v274
    %v316 = vunpack.c.l.b16 %v275
    %v317 = vunpack.c.l.b16 %v276
    %v318 = vunpack.c.l.b16 %v277
    %v319 = vunpack.c.l.b16 %v278
    %v320 = vunpack.c.l.b16 %v279
    %v321 = vunpack.c.l.b16 %v280
    %v322 = vunpack.c.l.b16 %v281
    %v323 = vunpack.c.l.b16 %v282
    %v324 = vunpack.c.l.b16 %v283
    %v325 = vunpack.c.l.b16 %v284
    %v326 = vunpack.c.l.b16 %v285
    %v327 = vunpack.c.l.b16 %v286
    %v328 = vunpack.c.l.b16 %v287
    %v329 = vpack.c.b16 %v314, %v313
    %v330 = vpack.c.b16 %v316, %v315
    %v331 = vpack.c.b16 %v318, %v317
    %v332 = vpack.c.b16 %v320, %v319
    %v333 = vpack.c.b16 %v322, %v321
    %v334 = vpack.c.b16 %v324, %v323
    %v335 = vpack.c.b16 %v326, %v325
    %v336 = vpack.c.b16 %v328, %v327
    %345 = vmatprep.subr.bf16.mxu0 0
    %346 = vmatpush1.bf16.msra.mxu0 %v329
    %347 = vmatprep.subr.bf16.mxu0 0
    %348 = vmatpush1.bf16.msra.mxu0 %v330
    %349 = vmatprep.subr.bf16.mxu0 0
    %350 = vmatpush1.bf16.msra.mxu0 %v331
    %351 = vmatprep.subr.bf16.mxu0 0
    %352 = vmatpush1.bf16.msra.mxu0 %v332
    %353 = vmatprep.subr.bf16.mxu0 0
    %354 = vmatpush1.bf16.msra.mxu0 %v333
    %355 = vmatprep.subr.bf16.mxu0 0
    %356 = vmatpush1.bf16.msra.mxu0 %v334
    %357 = vmatprep.subr.bf16.mxu0 0
    %358 = vmatpush1.bf16.msra.mxu0 %v335
    %359 = vmatprep.subr.bf16.mxu0 0
    %360 = vmatpush1.bf16.msra.mxu0 %v336
    %361 = vmatprep.subr.bf16.mxu0 0
    %362 = vmatpush1.bf16.msra.mxu0 0
    %363 = vmatprep.subr.bf16.mxu0 0
    %364 = vmatpush1.bf16.msra.mxu0 0
    %365 = vmatprep.subr.bf16.mxu0 0
    %366 = vmatpush1.bf16.msra.mxu0 0
    %367 = vmatprep.subr.bf16.mxu0 0
    %368 = vmatpush1.bf16.msra.mxu0 0
    %369 = vmatprep.subr.bf16.mxu0 0
    %370 = vmatpush1.bf16.msra.mxu0 0
    %371 = vmatprep.subr.bf16.mxu0 0
    %372 = vmatpush1.bf16.msra.mxu0 0
    %373 = vmatprep.subr.bf16.mxu0 0
    %374 = vmatpush1.bf16.msra.mxu0 0
    %375 = vmatprep.subr.bf16.mxu0 0
    %376 = vmatpush1.bf16.msra.mxu0 0
    %377 = vmatprep.mubr.bf16.mxu0 0
    %378 = vmatmul.mubr.bf16.gmra.mrb[0].mxu0 %v290
    %v379 = vpop.f32.mrb[0].mxu0
    %v380 = vadd.f32 %v295, %v379
    %v381 = vpop.f32.mrb[0].mxu0
    %v382 = vpop.f32.mrb[0].mxu0
    %v383 = vpop.f32.mrb[0].mxu0
    %384 = vdwg.mxu0
    %v385 = vmax.f32 %v380, 0.0
    %vm386 = vcmask 1041408
    %v387 = vsel %vm386, %v385, -inf
    %v388 = vrot.slane %v387, 4
    %v389 = vmax.f32 %v387, %v388
    %v390 = vrot.slane %v389, 2
    %v391 = vmax.f32 %v389, %v390
    %v392 = vrot.slane %v391, 1
    %v393 = vmax.f32 %v391, %v392
    %v394 = vsub.f32 %v385, %v393
    %v395 = vmul.f32 %v394, 1.442695
    %v396 = vpow.pop %v395
    %v397 = vsel %vm386, %v396, 0.0
    %v398 = vrot.slane %v397, 4
    %v399 = vadd.f32 %v397, %v398
    %v400 = vrot.slane %v399, 2
    %v401 = vadd.f32 %v399, %v400
    %v402 = vrot.slane %v401, 1
    %v403 = vadd.f32 %v401, %v402
    %v404 = vrcp.pop %v403
    %v405 = vmul.f32 %v396, %v404
    %406 = vst [vmem:[#allocation7] sm:$0x3] %v405
    // Predicated region
    $region22: #{tpu_custom_call.1} parent=1 // pred_check
      _
    $region23: #{tpu_custom_call.1} parent=1 // pred_check_branch
      %408 = sbr.rel (0) target = $region25
    $region24: #{tpu_custom_call.1} parent=1 // pred_region
      %s410 = ssub.s32 32, 32
      %411 = vsyncadd [#allocation4], %s410
      %s413 = sshll.u32 [#allocation7], 4
      %s414 = int_to_ptr.vmem [resolvable:$true] %s413
      %416 = dma.vmem_to_hbm [thread:$0]  %s414, 32, %s3, [#allocation4]
    $region25: #{tpu_custom_call.1} parent=1 // pred_fallthru
      _
    // Predicated region
    $region26: #{tpu_custom_call.1} parent=1 // pred_check
      _
    $region27: #{tpu_custom_call.1} parent=1 // pred_check_branch
      %418 = sbr.rel (0) target = $region29
    $region28: #{tpu_custom_call.1} parent=1 // pred_region
      %419 = dma.done [#allocation4], 32
    $region29: #{tpu_custom_call.1} parent=1 // pred_fallthru
      _
    %420 = vsyncpa [#allocation3], 1
    %421 = vsyncpa [#allocation6], 1
    %422 = vsyncpa [#allocation4], 1

</llo_original>
